<compile_context>
chip_gen: v6e
topology: v6e:2x2x1
jax: 0.10.0
libtpu: 0.0.40
codegen_flags: <defaults>
</compile_context>

<pallas_src>
import functools

import jax
import jax.numpy as jnp
from jax import lax
from jax.experimental import pallas as pl
from jax.experimental.pallas import tpu as pltpu


_LANE = 128
_VMEM_LIMIT_BYTES = 48 * 1024 * 1024   # raised scoped-VMEM limit (OK on v5e/v6e/v7x)
_TILE_BUDGET_BYTES = 36 * 1024 * 1024  # budget for double-buffered tiles + f32 temps
_MAX_TILE_ROWS = 1024


def _round_up(x, m):
    return (x + m - 1) // m * m


def _rmsnorm_kernel(x_ref, w_ref, o_ref, *, eps, inv_dim, true_dim):
    # Pass 1: f32 sum-of-squares over the lane axis.  If the block is wider
    # than the true hidden dim (lane padding), mask the padded lanes so they
    # do not contribute.  Dividing by the *true* dim via inv_dim reproduces
    # the unpadded mean exactly.
    xf = x_ref[...].astype(jnp.float32)
    if true_dim != xf.shape[-1]:
        lane = lax.broadcasted_iota(jnp.int32, xf.shape, xf.ndim - 1)
        sq = jnp.where(lane < true_dim, xf * xf, 0.0)
    else:
        sq = xf * xf
    inv = lax.rsqrt(jnp.sum(sq, axis=-1, keepdims=True) * inv_dim + eps)
    # Pass 2: re-read x (keeps the f32 copy short-lived instead of holding a
    # full f32 tile across the reduction), scale, cast back to x.dtype
    # (torch `.type_as(x)`), then apply the weight.
    normed = (x_ref[...].astype(jnp.float32) * inv).astype(x_ref.dtype)
    o_ref[...] = (normed * w_ref[...]).astype(o_ref.dtype)


def rmsnorm(x, weight, eps: float = 1e-5, tile_rows=None):
    """Apply RMSNorm over the last axis of x (torch RMSNorm semantics)."""
    orig_shape = x.shape
    dim = orig_shape[-1]
    rows = 1
    for s in orig_shape[:-1]:
        rows *= s

    # Output dtype follows torch promotion of (x.dtype, weight.dtype).
    # NOTE: with bf16 x and f32 weight this writes an f32 output (extra HBM
    # traffic) -- intentional to keep torch semantics; cast weight to x.dtype
    # in the caller if you want the cheaper writeback.
    out_dtype = jnp.promote_types(x.dtype, weight.dtype)

    in_isz = jnp.dtype(x.dtype).itemsize
    out_isz = jnp.dtype(out_dtype).itemsize
    # Dtype-aware sublane multiple: 8 (f32) / 16 (bf16) / 32 (int8, fp8).
    sub_mult = 8 * max(1, 4 // in_isz)

    # Lane-dense block width (multiple of 128).  No HBM padding: edge lanes
    # are masked inside the kernel and edge writes are dropped by Pallas.
    dim_p = _round_up(dim, _LANE)

    if tile_rows is None:
        # Per-row footprint: double-buffered input + output tiles plus ~2x f32
        # worth of compute temporaries.
        bytes_per_row = dim_p * (2 * in_isz + 2 * out_isz + 2 * 4)
        tile_rows = _TILE_BUDGET_BYTES // max(1, bytes_per_row)
        tile_rows = max(sub_mult, min(_MAX_TILE_ROWS, tile_rows))
    tile_rows = _round_up(tile_rows, sub_mult)
    # Don't make the tile bigger than the (sublane-rounded) row count.
    tile_rows = min(tile_rows, _round_up(rows, sub_mult))
    # Prefer >= 2 grid steps so the row axis can shard across both v7x TCs.
    if pl.cdiv(rows, tile_rows) < 2 and tile_rows > sub_mult:
        tile_rows = max(sub_mult, _round_up(tile_rows // 2, sub_mult))

    x2d = x.reshape(rows, dim)
    w2d = weight.reshape(1, dim)

    grid = (pl.cdiv(rows, tile_rows),)
    out = pl.pallas_call(
        functools.partial(_rmsnorm_kernel, eps=eps, inv_dim=1.0 / dim,
                          true_dim=dim),
        out_shape=jax.ShapeDtypeStruct((rows, dim), out_dtype),
        grid_spec=pltpu.PrefetchScalarGridSpec(
            num_scalar_prefetch=0,
            grid=grid,
            in_specs=[
                pl.BlockSpec((tile_rows, dim_p), lambda i: (i, 0)),
                pl.BlockSpec((1, dim_p), lambda i: (0, 0)),
            ],
            out_specs=pl.BlockSpec((tile_rows, dim_p), lambda i: (i, 0)),
        ),
        compiler_params=pltpu.CompilerParams(
            dimension_semantics=("parallel",),
            vmem_limit_bytes=_VMEM_LIMIT_BYTES,
        ),
    )(x2d, w2d)

    return out.reshape(orig_shape)


if __name__ == "__main__":
    # Small shapes consistent with an RMSNorm over the hidden dim:
    # batch=2, seq=8, hidden=32
    batch, seq, hidden = 2, 8, 32
    key = jax.random.PRNGKey(0)
    x = jax.random.normal(key, (batch, seq, hidden), dtype=jnp.float32)

    # Deterministic parameter init (matches nn.Parameter(torch.ones(dim))).
    weight = jnp.ones((hidden,), dtype=jnp.float32)
    eps = 1e-5

    out = rmsnorm(x, weight, eps=eps)
    out = jax.block_until_ready(out)

    # Pure-JAX reference check of the torch semantics.
    xf = x.astype(jnp.float32)
    ref = (xf * lax.rsqrt(jnp.mean(xf * xf, axis=-1, keepdims=True) + eps)
           ).astype(x.dtype) * weight
    assert out.shape == x.shape
    assert jnp.allclose(out, ref, atol=1e-5, rtol=1e-5)

    print("KERNEL_OK")
</pallas_src>

<mosaic_0001>
module attributes {stable_mosaic.version = 11 : i64} {
  func.func @_rmsnorm_kernel(%arg0: i32, %arg1: memref<8x128xf32, #tpu.memory_space<vmem>>, %arg2: memref<1x128xf32, #tpu.memory_space<vmem>>, %arg3: memref<8x128xf32, #tpu.memory_space<vmem>>) attributes {dimension_semantics = [#tpu.dimension_semantics<parallel>], iteration_bounds = array<i64: 2>, scalar_prefetch = 0 : i64, scratch_operands = 0 : i64, tpu.core_type = #tpu.core_type<tc>, window_params = [{transform_indices = @transform_0, window_bounds = array<i64: 8, 128>}, {transform_indices = @transform_1, window_bounds = array<i64: 1, 128>}, {transform_indices = @transform_2, window_bounds = array<i64: 8, 128>}]} {
    %c0 = arith.constant 0 : index
    %c0_0 = arith.constant 0 : index
    %0 = vector.load %arg1[%c0, %c0_0] : memref<8x128xf32, #tpu.memory_space<vmem>>, vector<8x128xf32>
    %1 = tpu.iota {dimensions = array<i32: 1>} : vector<8x128xi32>
    %c32_i32 = arith.constant 32 : i32
    %2 = vector.broadcast %c32_i32 : i32 to vector<8x128xi32>
    %3 = arith.cmpi slt, %1, %2 : vector<8x128xi32>
    %4 = arith.mulf %0, %0 : vector<8x128xf32>
    %cst = arith.constant 0.000000e+00 : f32
    %5 = vector.broadcast %cst : f32 to vector<8x128xf32>
    %6 = arith.select %3, %4, %5 : vector<8x128xi1>, vector<8x128xf32>
    %cst_1 = arith.constant dense<0.000000e+00> : vector<8xf32>
    %7 = vector.multi_reduction <add>, %6, %cst_1 [1] : vector<8x128xf32> to vector<8xf32>
    %8 = vector.shape_cast %7 : vector<8xf32> to vector<8x1xf32>
    %cst_2 = arith.constant 3.125000e-02 : f32
    %9 = vector.broadcast %cst_2 : f32 to vector<8x1xf32>
    %10 = arith.mulf %8, %9 : vector<8x1xf32>
    %cst_3 = arith.constant 9.99999974E-6 : f32
    %11 = vector.broadcast %cst_3 : f32 to vector<8x1xf32>
    %12 = arith.addf %10, %11 : vector<8x1xf32>
    %13 = math.rsqrt %12 : vector<8x1xf32>
    %c0_4 = arith.constant 0 : index
    %c0_5 = arith.constant 0 : index
    %14 = vector.load %arg1[%c0_4, %c0_5] : memref<8x128xf32, #tpu.memory_space<vmem>>, vector<8x128xf32>
    %15 = vector.broadcast %13 : vector<8x1xf32> to vector<8x128xf32>
    %16 = arith.mulf %14, %15 : vector<8x128xf32>
    %c0_6 = arith.constant 0 : index
    %c0_7 = arith.constant 0 : index
    %17 = vector.load %arg2[%c0_6, %c0_7] : memref<1x128xf32, #tpu.memory_space<vmem>>, vector<1x128xf32>
    %18 = vector.broadcast %17 : vector<1x128xf32> to vector<8x128xf32>
    %19 = arith.mulf %16, %18 : vector<8x128xf32>
    %c0_8 = arith.constant 0 : index
    %c0_9 = arith.constant 0 : index
    %20 = vector.load %arg3[%c0_8, %c0_9] : memref<8x128xf32, #tpu.memory_space<vmem>>, vector<8x128xf32>
    tpu.vector_store %arg3[%c0_8, %c0_9], %19 {strides = array<i32>} : memref<8x128xf32, #tpu.memory_space<vmem>>, vector<8x128xf32>,
    return
  }
  func.func @transform_0(%arg0: i32) -> (i32, i32) {
    %c0_i32 = arith.constant 0 : i32
    %c0_i32_0 = arith.constant 0 : i32
    return %arg0, %c0_i32 : i32, i32
  }
  func.func @transform_1(%arg0: i32) -> (i32, i32) {
    %c0_i32 = arith.constant 0 : i32
    %c0_i32_0 = arith.constant 0 : i32
    %c0_i32_1 = arith.constant 0 : i32
    return %c0_i32, %c0_i32_0 : i32, i32
  }
  func.func @transform_2(%arg0: i32) -> (i32, i32) {
    %c0_i32 = arith.constant 0 : i32
    %c0_i32_0 = arith.constant 0 : i32
    return %arg0, %c0_i32 : i32, i32
  }
}

</mosaic_0001>

<llo_original>
// kernel: tpu_custom_call.1
$region0: #{tpu_custom_call.1}
  #allocation0 [shape = 'u32[]', space=smem, size = 0x4, offset = 0x4, fixed_abs, tag = 'smem constant byte address 0x4 - core index']
  #allocation1 [shape = 'u32[144,128]{1,0:T(1,128)}', space=vmem, size = 0x12000, scoped, tag = 'internal scratch']
  %s0 = inlined_call_operand.hbm [shape: f32[16,32], index: 0, kind: input, shape index: {}]
  %s1 = inlined_call_operand.vmem [shape: f32[1,32], index: 1, kind: input, shape index: {}]
  %s2 = inlined_call_operand.hbm [shape: f32[16,32], index: 2, kind: output, shape index: {}]
  %s3 = sld [smem:[#allocation0]]
  $region45: #{tpu_custom_call.1} parent=0
    _
  %s5 = ssub.s32 1, %s3
  %s6 = scalar_select 0, %s5, %s3
  $region1: #{tpu_custom_call.1} parent=0
    #allocation2 [shape = 'u8[8192]{0}', space=vmem, size = 0x2000, scoped, tag = 'input window, operand 0']
    #allocation3 [shape = 's32[2]{0}', space=sflag, size = 0x8, scoped, tag = 'scoped memory for tpu_custom_call.1']
    #allocation4 [shape = 's32[2]{0}', space=sflag, size = 0x8, scoped, tag = 'scoped memory for tpu_custom_call.1']
    #allocation5 [shape = 'u8[8192]{0}', space=vmem, size = 0x2000, scoped, tag = 'output window, operand 0']
    %7 = vsyncpa [#allocation3], 0
    %s8 = scalar_lea.sflag [#allocation3], 1
    %9 = vsyncpa %s8, 0
    %10 = vsyncpa [#allocation4], 0
    %s11 = scalar_lea.sflag [#allocation4], 1
    %12 = vsyncpa %s11, 0
    loop: start=0, step=1, limit=4
    $region2: #{tpu_custom_call.1} parent=1 // loop_pre_header
      _
    $region3: #{tpu_custom_call.1} parent=1 // loop_header
      %s14 = sphi 0, %s18
      %p15 = scmp.ge.s32.totalorder %s14, 4
      %s24 = sphi 0, %s26
      %s27 = sphi 0, %s24
      %s28 = sphi 0, %s27
      %s44 = sphi 0, %s28
      %s48 = sphi 0, %s48
      %s50 = sphi 0, %s48
      %s51 = sphi 0, %s50
      %s65 = sphi 0, %s51
      %s71 = sphi 0, %s73
      %s74 = sphi 0, %s71
      %s75 = sphi 0, %s74
      %s91 = sphi 0, %s75
    $region4: #{tpu_custom_call.1} parent=1 // loop_header_branch
      %17 = sbr.rel (%p15) target = $region8
    $region5: #{tpu_custom_call.1} parent=1 // loop_body
      %s19 = ssub.s32 %s14, 1
      %s20 = ssub.s32 %s14, 2
      %s21 = sadd.s32 %s14, 1
      %s22 = ssub.s32 %s14, %s21
      %p23 = scmp.eq.s32.totalorder %s22, 0
      %s25 = sadd.s32 %s24, 1
      %s26 = scalar_select %p23, %s24, %s25
      %p29 = pneg %p23
      %p30 = scmp.eq.s32.totalorder %s14, 1
      %p31 = por %p29, %p30
      %p32 = scmp.ne.s32.totalorder %s24, %s27
      %p33 = scmp.eq.s32.totalorder %s14, 0
      %p34 = por %p32, %p33
      %p35 = scmp.ne.s32.totalorder %s24, %s27
      %p36 = scmp.eq.s32.totalorder %s19, 1
      %p37 = por %p35, %p36
      %p38 = scmp.ne.s32.totalorder %s27, %s28
      %p39 = scmp.eq.s32.totalorder %s19, 0
      %p40 = por %p38, %p39
      %p41 = scmp.ne.s32.totalorder %s27, %s28
      %p42 = scmp.eq.s32.totalorder %s20, 1
      %p43 = por %p41, %p42
      %p45 = scmp.ne.s32.totalorder %s28, %s44
      %p46 = scmp.eq.s32.totalorder %s20, 0
      %p47 = por %p45, %p46
      %s49 = sadd.s32 %s48, 1
      %p52 = scmp.eq.s32.totalorder %s14, 1
      %p53 = scmp.ne.s32.totalorder %s48, %s50
      %p54 = scmp.eq.s32.totalorder %s14, 0
      %p55 = por %p53, %p54
      %p56 = scmp.ne.s32.totalorder %s48, %s50
      %p57 = scmp.eq.s32.totalorder %s19, 1
      %p58 = por %p56, %p57
      %p59 = scmp.ne.s32.totalorder %s50, %s51
      %p60 = scmp.eq.s32.totalorder %s19, 0
      %p61 = por %p59, %p60
      %p62 = scmp.ne.s32.totalorder %s50, %s51
      %p63 = scmp.eq.s32.totalorder %s20, 1
      %p64 = por %p62, %p63
      %p66 = scmp.ne.s32.totalorder %s51, %s65
      %p67 = scmp.eq.s32.totalorder %s20, 0
      %p68 = por %p66, %p67
      %s69 = ssub.s32 %s14, %s21
      %p70 = scmp.eq.s32.totalorder %s69, 0
      %s72 = sadd.s32 %s71, 1
      %s73 = scalar_select %p70, %s71, %s72
      %p76 = pneg %p70
      %p77 = scmp.eq.s32.totalorder %s14, 1
      %p78 = por %p76, %p77
      %p79 = scmp.ne.s32.totalorder %s71, %s74
      %p80 = scmp.eq.s32.totalorder %s14, 0
      %p81 = por %p79, %p80
      %p82 = scmp.ne.s32.totalorder %s71, %s74
      %p83 = scmp.eq.s32.totalorder %s19, 1
      %p84 = por %p82, %p83
      %p85 = scmp.ne.s32.totalorder %s74, %s75
      %p86 = scmp.eq.s32.totalorder %s19, 0
      %p87 = por %p85, %p86
      %p88 = scmp.ne.s32.totalorder %s74, %s75
      %p89 = scmp.eq.s32.totalorder %s20, 1
      %p90 = por %p88, %p89
      %p92 = scmp.ne.s32.totalorder %s75, %s91
      %p93 = scmp.eq.s32.totalorder %s20, 0
      %p94 = por %p92, %p93
      %p95 = scmp.le.s32.totalorder 1, %s14
      %p96 = scmp.lt.s32.totalorder %s14, 3
      %p97 = pnand %p95, %p96
      %p98 = pneg %p97
      // Predicated region
      $region9: #{tpu_custom_call.1} parent=5 // pred_check
        _
      $region10: #{tpu_custom_call.1} parent=5 // pred_check_branch
        %100 = sbr.rel (%p97) target = $region12
      $region11: #{tpu_custom_call.1} parent=5 // pred_region
        %s101 = ssub.s32 %s14, 1
        // Predicated region
        $region13: #{tpu_custom_call.1} parent=11 // pred_check
          %p102 = pneg %p61
        $region14: #{tpu_custom_call.1} parent=11 // pred_check_branch
          %104 = sbr.rel (%p102) target = $region16
        $region15: #{tpu_custom_call.1} parent=11 // pred_region
          _
        $region16: #{tpu_custom_call.1} parent=11 // pred_fallthru
          _
      $region12: #{tpu_custom_call.1} parent=5 // pred_fallthru
        _
      %p105 = scmp.lt.s32.totalorder %s14, 2
      // Predicated region
      $region17: #{tpu_custom_call.1} parent=5 // pred_check
        %p106 = pneg %p105
      $region18: #{tpu_custom_call.1} parent=5 // pred_check_branch
        %108 = sbr.rel (%p106) target = $region20
      $region19: #{tpu_custom_call.1} parent=5 // pred_region
        // Predicated region
        $region21: #{tpu_custom_call.1} parent=19 // pred_check
          %p109 = pneg %p34
        $region22: #{tpu_custom_call.1} parent=19 // pred_check_branch
          %111 = sbr.rel (%p109) target = $region24
        $region23: #{tpu_custom_call.1} parent=19 // pred_region
          %s112 = sand.u32 %s24, 1
          %s113 = scalar_lea.sflag [#allocation3], %s112
          %s114 = sand.u32 %s24, 1
          %s115 = smul.addr %s114, 8
          %s116 = scalar_lea.vmem [#allocation2], %s115
          %s118 = ssub.s32 128, 128
          %119 = vsyncadd %s113, %s118
          %s120 = smul.addr %s14, 128
          %s121 = scalar_lea.hbm %s0, %s120
          %s123 = sshll.u32 %s116, 4
          %s124 = int_to_ptr.vmem [resolvable:$true] %s123
          %126 = dma.hbm_to_vmem [thread:$0]  %s121, 128, %s124, %s113
        $region24: #{tpu_custom_call.1} parent=19 // pred_fallthru
          _
      $region20: #{tpu_custom_call.1} parent=5 // pred_fallthru
        _
      %p127 = scmp.le.s32.totalorder 1, %s14
      %p128 = scmp.lt.s32.totalorder %s14, 3
      %p129 = pnand %p127, %p128
      %p130 = pneg %p129
      // Predicated region
      $region25: #{tpu_custom_call.1} parent=5 // pred_check
        _
      $region26: #{tpu_custom_call.1} parent=5 // pred_check_branch
        %132 = sbr.rel (%p129) target = $region28
      $region27: #{tpu_custom_call.1} parent=5 // pred_region
        %s133 = ssub.s32 %s14, 1
        %s134 = sand.u32 %s27, 1
        %s135 = scalar_lea.sflag [#allocation3], %s134
        %s136 = sand.u32 %s27, 1
        %s137 = smul.addr %s136, 8
        %s138 = scalar_lea.vmem [#allocation2], %s137
        // Predicated region
        $region29: #{tpu_custom_call.1} parent=27 // pred_check
          %p139 = pneg %p40
        $region30: #{tpu_custom_call.1} parent=27 // pred_check_branch
          %141 = sbr.rel (%p139) target = $region32
        $region31: #{tpu_custom_call.1} parent=27 // pred_region
          %142 = dma.done %s135, 128
        $region32: #{tpu_custom_call.1} parent=27 // pred_fallthru
          _
        %s143 = sand.u32 %s27, 1
        %s144 = scalar_lea.sflag [#allocation3], %s143
        %s145 = sand.u32 %s27, 1
        %s146 = smul.addr %s145, 8
        %s147 = scalar_lea.vmem [#allocation2], %s146
        %p148 = pneg %p40
        %p149 = pneg %p37
        %p150 = pneg %p61
        %p151 = pneg %p58
        %p152 = pneg %p87
        %p153 = pneg %p84
        %s154 = sand.u32 %s74, 1
        %s155 = scalar_lea.sflag [#allocation4], %s154
        %s156 = sand.u32 %s74, 1
        %s157 = smul.addr %s156, 8
        %s158 = scalar_lea.vmem [#allocation5], %s157
        %v159 = vld [vmem:[%s138] sm:$0xff]
        %v160 = vlaneseq
        %v161 = vand.u32 %v160, 127
        %vm162 = vcmp.lt.s32.totalorder %v161, 32
        %v163 = vmul.f32 %v159, %v159
        %v164 = vsel %vm162, %v163, 0.0
        %165 = vadd.xlane.f32.xlu0 %v164
        %v166 = vpop.xlane.xlu0 %165
        %v167 = vmul.f32 %v166, 0.03125
        %v168 = vadd.f32 %v167, 1e-05
        %v169 = vrsqrt.pop %v168
        %v170 = vmul.f32 %v159, %v169
        %v171 = vld [vmem:[%s1] sm:$0x1]
        %v173 = vlaneseq
        %v174 = vshrl.u32 %v173, 7
        %v175 = vsub.s32 0, %v174
        %v176 = vrot.slane %v171, %v175
        %v178 = vmul.f32 %v170, %v176
        %179 = vst [vmem:[%s158] sm:$0xff] %v178
        %s180 = sand.u32 %s74, 1
        %s181 = scalar_lea.sflag [#allocation4], %s180
        %s182 = sand.u32 %s74, 1
        %s183 = smul.addr %s182, 8
        %s184 = scalar_lea.vmem [#allocation5], %s183
        // Predicated region
        $region33: #{tpu_custom_call.1} parent=27 // pred_check
          %p185 = pneg %p84
        $region34: #{tpu_custom_call.1} parent=27 // pred_check_branch
          %187 = sbr.rel (%p185) target = $region36
        $region35: #{tpu_custom_call.1} parent=27 // pred_region
          %s189 = ssub.s32 128, 128
          %190 = vsyncadd %s181, %s189
          %s191 = smul.addr %s19, 128
          %s192 = scalar_lea.hbm %s2, %s191
          %s194 = sshll.u32 %s184, 4
          %s195 = int_to_ptr.vmem [resolvable:$true] %s194
          %197 = dma.vmem_to_hbm [thread:$0]  %s195, 128, %s192, %s181
        $region36: #{tpu_custom_call.1} parent=27 // pred_fallthru
          _
      $region28: #{tpu_custom_call.1} parent=5 // pred_fallthru
        _
      %p198 = scmp.le.s32.totalorder 2, %s14
      // Predicated region
      $region37: #{tpu_custom_call.1} parent=5 // pred_check
        %p199 = pneg %p198
      $region38: #{tpu_custom_call.1} parent=5 // pred_check_branch
        %201 = sbr.rel (%p199) target = $region40
      $region39: #{tpu_custom_call.1} parent=5 // pred_region
        %s202 = ssub.s32 %s14, 2
        // Predicated region
        $region41: #{tpu_custom_call.1} parent=39 // pred_check
          %p203 = pneg %p90
        $region42: #{tpu_custom_call.1} parent=39 // pred_check_branch
          %205 = sbr.rel (%p203) target = $region44
        $region43: #{tpu_custom_call.1} parent=39 // pred_region
          %s206 = sand.u32 %s75, 1
          %s207 = scalar_lea.sflag [#allocation4], %s206
          %s208 = sand.u32 %s75, 1
          %s209 = smul.addr %s208, 8
          %s210 = scalar_lea.vmem [#allocation5], %s209
          %211 = dma.done %s207, 128
        $region44: #{tpu_custom_call.1} parent=39 // pred_fallthru
          _
      $region40: #{tpu_custom_call.1} parent=5 // pred_fallthru
        _
    $region6: #{tpu_custom_call.1} parent=1 // loop_footer
      %s18 = sadd.s32 1, %s14
    $region7: #{tpu_custom_call.1} parent=1 // loop_footer_branch
      %13 = sbr.rel target = $region3
    $region8: #{tpu_custom_call.1} parent=1 // loop_exit
      _
    %212 = vsyncpa [#allocation3], 1
    %s213 = scalar_lea.sflag [#allocation3], 1
    %214 = vsyncpa %s213, 1
    %215 = vsyncpa [#allocation4], 1
    %s216 = scalar_lea.sflag [#allocation4], 1
    %217 = vsyncpa %s216, 1

</llo_original>
